<compile_context>
chip_gen: v5e
topology: v5e:2x2
jax: 0.10.0
libtpu: 0.0.40
codegen_flags: <defaults>
</compile_context>

<pallas_src>
import functools

import jax
import jax.numpy as jnp
from jax import lax
from jax.experimental import pallas as pl
from jax.experimental.pallas import tpu as pltpu

GROUPS = 8
EPS = 1e-5


def _round_up(x, m):
    return ((x + m - 1) // m) * m


def _temporal_kernel(x_ref, w_ref, b_ref, g_ref, be_ref, ssel_ref, srow_ref, p_ref,
                     o_ref, *, final, inv_n):
    # x_ref   : (BT, K*Cin)    bf16   im2col rows for `block_b` samples
    # w_ref   : (K*Cin, Cp)    bf16   conv weight (Cout padded to Cp, lane-dense)
    # b_ref   : (1, Cp)        f32    conv bias
    # g_ref   : (1, Cp)        f32    GroupNorm gamma
    # be_ref  : (1, Cp)        f32    GroupNorm beta
    # ssel_ref: (Bblk, BT)     f32    per-sample row-sum selector
    # srow_ref: (BT, Bblk)     f32    per-sample broadcast-back selector
    # p_ref   : (Cp, Cp)       f32    group-sum projector (padded channels excluded)
    # o_ref   : (BT, Cp)

    # ---- Conv1d: single im2col matmul on the MXU (bf16 in, f32 accumulate) ----
    acc = jnp.dot(x_ref[...], w_ref[...], preferred_element_type=jnp.float32)
    acc = acc + b_ref[...]

    if final:
        o_ref[...] = acc.astype(o_ref.dtype)
        return

    # ---- GroupNorm(8): per-sample, per-group mean/var via small matmuls ----
    s1 = jnp.dot(ssel_ref[...], acc, preferred_element_type=jnp.float32)        # (Bblk, Cp)
    s2 = jnp.dot(ssel_ref[...], acc * acc, preferred_element_type=jnp.float32)  # (Bblk, Cp)
    mean_c = jnp.dot(s1, p_ref[...], preferred_element_type=jnp.float32) * inv_n
    msq_c = jnp.dot(s2, p_ref[...], preferred_element_type=jnp.float32) * inv_n
    var_c = jnp.maximum(msq_c - mean_c * mean_c, 0.0)      # clamp cancellation
    inv_c = lax.rsqrt(var_c + EPS)                                               # (Bblk, Cp)
    mean_r = jnp.dot(srow_ref[...], mean_c, preferred_element_type=jnp.float32)  # (BT, Cp)
    inv_r = jnp.dot(srow_ref[...], inv_c, preferred_element_type=jnp.float32)    # (BT, Cp)

    yn = (acc - mean_r) * inv_r * g_ref[...] + be_ref[...]

    # ---- Mish(x) = x * tanh(softplus(x)) with a single exp:
    #      tanh(log(1 + e^x)) = (p^2 + 2p) / (p^2 + 2p + 2),  p = e^x
    p = jnp.exp(jnp.minimum(yn, 20.0))
    num = p * (p + 2.0)
    t = num * pl.reciprocal(num + 2.0, approx=True)
    o_ref[...] = (yn * t).astype(o_ref.dtype)


def temporal_helper_tlast(x_tlast, w, b, gamma=None, beta=None, *, final=False,
                          block_b=None):
    """Channel-last core. x_tlast: [B, T, Cin] -> [B, T, Cout]."""
    B, T, Cin = x_tlast.shape
    Cout, Cin_w, K = w.shape
    assert Cin_w == Cin
    pad = K // 2
    G = GROUPS
    if not final:
        assert Cout % G == 0, "GroupNorm(8) requires out_channels % 8 == 0"
    if gamma is None:
        gamma = jnp.ones((Cout,), jnp.float32)
    if beta is None:
        beta = jnp.zeros((Cout,), jnp.float32)

    # im2col (done once in the wrapper -> single matmul per grid step in the kernel)
    xp = jnp.pad(x_tlast, ((0, 0), (pad, pad), (0, 0)))
    xim = jnp.concatenate([xp[:, k:k + T, :] for k in range(K)], axis=-1)  # [B,T,K*Cin]
    KC = K * Cin
    xim = xim.reshape(B * T, KC).astype(jnp.bfloat16)

    # lane-dense output channels (padded channels carry zero weight/bias/affine)
    Cp = _round_up(Cout, 128)
    w2 = jnp.transpose(w, (2, 1, 0)).reshape(KC, Cout)
    w2 = jnp.pad(w2, ((0, 0), (0, Cp - Cout))).astype(jnp.bfloat16)
    b2 = jnp.pad(b.astype(jnp.float32), (0, Cp - Cout)).reshape(1, Cp)
    g2 = jnp.pad(gamma.astype(jnp.float32), (0, Cp - Cout)).reshape(1, Cp)
    be2 = jnp.pad(beta.astype(jnp.float32), (0, Cp - Cout)).reshape(1, Cp)

    # samples per grid step: fill the MXU M dimension (~256 rows).  For very
    # small B on v7x you may prefer block_b=1 so both TensorCores get grid work.
    if block_b is None:
        block_b = 1
        for d in range(B, 0, -1):
            if B % d == 0 and d * T <= 256:
                block_b = d
                break
    assert B % block_b == 0
    if (block_b * T) % 8 != 0 and block_b != B:
        block_b = B
    BT = block_b * T
    nsteps = B // block_b

    # precomputed GroupNorm helper matrices (hoisted out of the kernel)
    cg = max(Cout // G, 1)
    ch = jnp.arange(Cp)
    gid = jnp.where(ch < Cout, ch // cg, -1)
    pmat = ((gid[:, None] == gid[None, :]) & (gid[:, None] >= 0)).astype(jnp.float32)
    rows = jnp.arange(BT)
    ssel = (rows[None, :] // T == jnp.arange(block_b)[:, None]).astype(jnp.float32)
    srow = ssel.T

    kern = functools.partial(_temporal_kernel, final=final, inv_n=1.0 / float(T * cg))
    out = pl.pallas_call(
        kern,
        out_shape=jax.ShapeDtypeStruct((B * T, Cp), x_tlast.dtype),
        grid=(nsteps,),
        in_specs=[
            pl.BlockSpec((BT, KC), lambda i: (i, 0)),
            pl.BlockSpec((KC, Cp), lambda i: (0, 0)),
            pl.BlockSpec((1, Cp), lambda i: (0, 0)),
            pl.BlockSpec((1, Cp), lambda i: (0, 0)),
            pl.BlockSpec((1, Cp), lambda i: (0, 0)),
            pl.BlockSpec((block_b, BT), lambda i: (0, 0)),
            pl.BlockSpec((BT, block_b), lambda i: (0, 0)),
            pl.BlockSpec((Cp, Cp), lambda i: (0, 0)),
        ],
        out_specs=pl.BlockSpec((BT, Cp), lambda i: (i, 0)),
        # Per-step working set is tiny (<1 MiB) and fits every generation's
        # default scoped VMEM; raise vmem_limit_bytes only if blocks are scaled up.
        compiler_params=pltpu.CompilerParams(dimension_semantics=("parallel",)),
    )(xim, w2, b2, g2, be2, ssel, srow, pmat)

    return out[:, :Cout].reshape(B, T, Cout)


def temporal_helper(x, w, b, gamma=None, beta=None, *, final=False, block_b=None):
    """PyTorch-compatible NCT entry point. x: [B, C_in, T] -> [B, C_out, T].

    Prefer temporal_helper_tlast (channel-last) inside a real model so the HBM
    round-trip transposes below disappear.
    """
    xt = jnp.transpose(x, (0, 2, 1))
    out = temporal_helper_tlast(xt, w, b, gamma, beta, final=final, block_b=block_b)
    return jnp.transpose(out, (0, 2, 1))


def reference(x, w, b, gamma, beta, *, final=False):
    """Pure-JAX f32 reference matching the PyTorch module."""
    pad = w.shape[2] // 2
    y = lax.conv_general_dilated(
        x, w, window_strides=(1,), padding=[(pad, pad)],
        dimension_numbers=("NCH", "OIH", "NCH")) + b[None, :, None]
    if final:
        return y
    B, C, T = y.shape
    yg = y.reshape(B, GROUPS, (C // GROUPS) * T)
    mean = yg.mean(-1, keepdims=True)
    var = ((yg - mean) ** 2).mean(-1, keepdims=True)
    yn = (yg - mean) / jnp.sqrt(var + EPS)
    yn = yn.reshape(B, C, T) * gamma[None, :, None] + beta[None, :, None]
    return yn * jnp.tanh(jax.nn.softplus(yn))


if __name__ == "__main__":
    key = jax.random.PRNGKey(0)
    B, Cin, Cout, T, K = 2, 16, 32, 16, 3   # out_channels divisible by 8 (GroupNorm)
    kx, kw, kb, kg, kbe = jax.random.split(key, 5)

    x = jax.random.normal(kx, (B, Cin, T), jnp.float32)
    w = 0.1 * jax.random.normal(kw, (Cout, Cin, K), jnp.float32)     # Conv1d weight
    b = 0.1 * jax.random.normal(kb, (Cout,), jnp.float32)            # Conv1d bias
    gamma = 1.0 + 0.1 * jax.random.normal(kg, (Cout,), jnp.float32)  # GN weight
    beta = 0.1 * jax.random.normal(kbe, (Cout,), jnp.float32)        # GN bias

    # non-final branch: Conv1d -> GroupNorm(8) -> Mish
    out = temporal_helper(x, w, b, gamma, beta, final=False)
    jax.block_until_ready(out)
    ref = reference(x, w, b, gamma, beta, final=False)
    assert out.shape == (B, Cout, T)
    # bf16 matmul operands -> compare at bf16-appropriate tolerance
    assert jnp.allclose(out, ref, atol=3e-2, rtol=3e-2), float(jnp.max(jnp.abs(out - ref)))

    # final branch: Conv1d only
    out_f = temporal_helper(x, w, b, gamma, beta, final=True)
    jax.block_until_ready(out_f)
    ref_f = reference(x, w, b, gamma, beta, final=True)
    assert out_f.shape == (B, Cout, T)
    assert jnp.allclose(out_f, ref_f, atol=3e-2, rtol=3e-2), float(jnp.max(jnp.abs(out_f - ref_f)))

    print("KERNEL_OK")
</pallas_src>

<mosaic_0001>
module attributes {stable_mosaic.version = 11 : i64} {
  func.func @_temporal_kernel(%arg0: i32, %arg1: memref<32x48xbf16, #tpu.memory_space<vmem>>, %arg2: memref<48x128xbf16, #tpu.memory_space<vmem>>, %arg3: memref<1x128xf32, #tpu.memory_space<vmem>>, %arg4: memref<1x128xf32, #tpu.memory_space<vmem>>, %arg5: memref<1x128xf32, #tpu.memory_space<vmem>>, %arg6: memref<2x32xf32, #tpu.memory_space<vmem>>, %arg7: memref<32x2xf32, #tpu.memory_space<vmem>>, %arg8: memref<128x128xf32, #tpu.memory_space<vmem>>, %arg9: memref<32x128xf32, #tpu.memory_space<vmem>>) attributes {dimension_semantics = [#tpu.dimension_semantics<parallel>], iteration_bounds = array<i64: 1>, scalar_prefetch = 0 : i64, scratch_operands = 0 : i64, tpu.core_type = #tpu.core_type<tc>, window_params = [{transform_indices = @transform_0, window_bounds = array<i64: 32, 48>}, {pipeline_mode = #tpu.pipeline_mode<synchronous>, transform_indices = @transform_1, window_bounds = array<i64: 48, 128>}, {pipeline_mode = #tpu.pipeline_mode<synchronous>, transform_indices = @transform_2, window_bounds = array<i64: 1, 128>}, {pipeline_mode = #tpu.pipeline_mode<synchronous>, transform_indices = @transform_3, window_bounds = array<i64: 1, 128>}, {pipeline_mode = #tpu.pipeline_mode<synchronous>, transform_indices = @transform_4, window_bounds = array<i64: 1, 128>}, {pipeline_mode = #tpu.pipeline_mode<synchronous>, transform_indices = @transform_5, window_bounds = array<i64: 2, 32>}, {pipeline_mode = #tpu.pipeline_mode<synchronous>, transform_indices = @transform_6, window_bounds = array<i64: 32, 2>}, {pipeline_mode = #tpu.pipeline_mode<synchronous>, transform_indices = @transform_7, window_bounds = array<i64: 128, 128>}, {transform_indices = @transform_8, window_bounds = array<i64: 32, 128>}]} {
    %c0 = arith.constant 0 : index
    %c0_0 = arith.constant 0 : index
    %0 = vector.load %arg1[%c0, %c0_0] : memref<32x48xbf16, #tpu.memory_space<vmem>>, vector<32x48xbf16>
    %c0_1 = arith.constant 0 : index
    %c0_2 = arith.constant 0 : index
    %1 = vector.load %arg2[%c0_1, %c0_2] : memref<48x128xbf16, #tpu.memory_space<vmem>>, vector<48x128xbf16>
    %cst = arith.constant dense<0.000000e+00> : vector<32x128xf32>
    %2 = tpu.matmul %0, %1, %cst {dimension_numbers = #tpu.dot_dimension_numbers<[1], [0], [0], [1], [0, 0, 1, 1], [], []>} : vector<32x48xbf16>, vector<48x128xbf16>, vector<32x128xf32> -> vector<32x128xf32>
    %c0_3 = arith.constant 0 : index
    %c0_4 = arith.constant 0 : index
    %3 = vector.load %arg3[%c0_3, %c0_4] : memref<1x128xf32, #tpu.memory_space<vmem>>, vector<1x128xf32>
    %4 = vector.broadcast %3 : vector<1x128xf32> to vector<32x128xf32>
    %5 = arith.addf %2, %4 : vector<32x128xf32>
    %c0_5 = arith.constant 0 : index
    %c0_6 = arith.constant 0 : index
    %6 = vector.load %arg6[%c0_5, %c0_6] : memref<2x32xf32, #tpu.memory_space<vmem>>, vector<2x32xf32>
    %cst_7 = arith.constant dense<0.000000e+00> : vector<2x128xf32>
    %7 = tpu.matmul %6, %5, %cst_7 {dimension_numbers = #tpu.dot_dimension_numbers<[1], [0], [0], [1], [0, 0, 1, 1], [], []>} : vector<2x32xf32>, vector<32x128xf32>, vector<2x128xf32> -> vector<2x128xf32>
    %c0_8 = arith.constant 0 : index
    %c0_9 = arith.constant 0 : index
    %8 = vector.load %arg6[%c0_8, %c0_9] : memref<2x32xf32, #tpu.memory_space<vmem>>, vector<2x32xf32>
    %9 = arith.mulf %5, %5 : vector<32x128xf32>
    %cst_10 = arith.constant dense<0.000000e+00> : vector<2x128xf32>
    %10 = tpu.matmul %8, %9, %cst_10 {dimension_numbers = #tpu.dot_dimension_numbers<[1], [0], [0], [1], [0, 0, 1, 1], [], []>} : vector<2x32xf32>, vector<32x128xf32>, vector<2x128xf32> -> vector<2x128xf32>
    %c0_11 = arith.constant 0 : index
    %c0_12 = arith.constant 0 : index
    %11 = vector.load %arg8[%c0_11, %c0_12] : memref<128x128xf32, #tpu.memory_space<vmem>>, vector<128x128xf32>
    %cst_13 = arith.constant dense<0.000000e+00> : vector<2x128xf32>
    %12 = tpu.matmul %7, %11, %cst_13 {dimension_numbers = #tpu.dot_dimension_numbers<[1], [0], [0], [1], [0, 0, 1, 1], [], []>} : vector<2x128xf32>, vector<128x128xf32>, vector<2x128xf32> -> vector<2x128xf32>
    %cst_14 = arith.constant 1.562500e-02 : f32
    %13 = vector.broadcast %cst_14 : f32 to vector<2x128xf32>
    %14 = arith.mulf %12, %13 : vector<2x128xf32>
    %c0_15 = arith.constant 0 : index
    %c0_16 = arith.constant 0 : index
    %15 = vector.load %arg8[%c0_15, %c0_16] : memref<128x128xf32, #tpu.memory_space<vmem>>, vector<128x128xf32>
    %cst_17 = arith.constant dense<0.000000e+00> : vector<2x128xf32>
    %16 = tpu.matmul %10, %15, %cst_17 {dimension_numbers = #tpu.dot_dimension_numbers<[1], [0], [0], [1], [0, 0, 1, 1], [], []>} : vector<2x128xf32>, vector<128x128xf32>, vector<2x128xf32> -> vector<2x128xf32>
    %cst_18 = arith.constant 1.562500e-02 : f32
    %17 = vector.broadcast %cst_18 : f32 to vector<2x128xf32>
    %18 = arith.mulf %16, %17 : vector<2x128xf32>
    %19 = arith.mulf %14, %14 : vector<2x128xf32>
    %20 = arith.subf %18, %19 : vector<2x128xf32>
    %cst_19 = arith.constant 0.000000e+00 : f32
    %21 = vector.broadcast %cst_19 : f32 to vector<2x128xf32>
    %22 = arith.maximumf %20, %21 : vector<2x128xf32>
    %cst_20 = arith.constant 9.99999974E-6 : f32
    %23 = vector.broadcast %cst_20 : f32 to vector<2x128xf32>
    %24 = arith.addf %22, %23 : vector<2x128xf32>
    %25 = math.rsqrt %24 : vector<2x128xf32>
    %c0_21 = arith.constant 0 : index
    %c0_22 = arith.constant 0 : index
    %26 = vector.load %arg7[%c0_21, %c0_22] : memref<32x2xf32, #tpu.memory_space<vmem>>, vector<32x2xf32>
    %cst_23 = arith.constant dense<0.000000e+00> : vector<32x128xf32>
    %27 = tpu.matmul %26, %14, %cst_23 {dimension_numbers = #tpu.dot_dimension_numbers<[1], [0], [0], [1], [0, 0, 1, 1], [], []>} : vector<32x2xf32>, vector<2x128xf32>, vector<32x128xf32> -> vector<32x128xf32>
    %c0_24 = arith.constant 0 : index
    %c0_25 = arith.constant 0 : index
    %28 = vector.load %arg7[%c0_24, %c0_25] : memref<32x2xf32, #tpu.memory_space<vmem>>, vector<32x2xf32>
    %cst_26 = arith.constant dense<0.000000e+00> : vector<32x128xf32>
    %29 = tpu.matmul %28, %25, %cst_26 {dimension_numbers = #tpu.dot_dimension_numbers<[1], [0], [0], [1], [0, 0, 1, 1], [], []>} : vector<32x2xf32>, vector<2x128xf32>, vector<32x128xf32> -> vector<32x128xf32>
    %30 = arith.subf %5, %27 : vector<32x128xf32>
    %31 = arith.mulf %30, %29 : vector<32x128xf32>
    %c0_27 = arith.constant 0 : index
    %c0_28 = arith.constant 0 : index
    %32 = vector.load %arg4[%c0_27, %c0_28] : memref<1x128xf32, #tpu.memory_space<vmem>>, vector<1x128xf32>
    %33 = vector.broadcast %32 : vector<1x128xf32> to vector<32x128xf32>
    %34 = arith.mulf %31, %33 : vector<32x128xf32>
    %c0_29 = arith.constant 0 : index
    %c0_30 = arith.constant 0 : index
    %35 = vector.load %arg5[%c0_29, %c0_30] : memref<1x128xf32, #tpu.memory_space<vmem>>, vector<1x128xf32>
    %36 = vector.broadcast %35 : vector<1x128xf32> to vector<32x128xf32>
    %37 = arith.addf %34, %36 : vector<32x128xf32>
    %cst_31 = arith.constant 2.000000e+01 : f32
    %38 = vector.broadcast %cst_31 : f32 to vector<32x128xf32>
    %39 = arith.minimumf %37, %38 : vector<32x128xf32>
    %40 = math.exp %39 : vector<32x128xf32>
    %cst_32 = arith.constant 2.000000e+00 : f32
    %41 = vector.broadcast %cst_32 : f32 to vector<32x128xf32>
    %42 = arith.addf %40, %41 : vector<32x128xf32>
    %43 = arith.mulf %40, %42 : vector<32x128xf32>
    %cst_33 = arith.constant 2.000000e+00 : f32
    %44 = vector.broadcast %cst_33 : f32 to vector<32x128xf32>
    %45 = arith.addf %43, %44 : vector<32x128xf32>
    %46 = tpu.reciprocal %45 {approx = true} : vector<32x128xf32> -> vector<32x128xf32>
    %47 = arith.mulf %43, %46 : vector<32x128xf32>
    %48 = arith.mulf %37, %47 : vector<32x128xf32>
    %c0_34 = arith.constant 0 : index
    %c0_35 = arith.constant 0 : index
    %49 = vector.load %arg9[%c0_34, %c0_35] : memref<32x128xf32, #tpu.memory_space<vmem>>, vector<32x128xf32>
    tpu.vector_store %arg9[%c0_34, %c0_35], %48 {strides = array<i32>} : memref<32x128xf32, #tpu.memory_space<vmem>>, vector<32x128xf32>,
    return
  }
  func.func @transform_0(%arg0: i32) -> (i32, i32) {
    %c0_i32 = arith.constant 0 : i32
    %c0_i32_0 = arith.constant 0 : i32
    return %arg0, %c0_i32 : i32, i32
  }
  func.func @transform_1(%arg0: i32) -> (i32, i32) {
    %c0_i32 = arith.constant 0 : i32
    %c0_i32_0 = arith.constant 0 : i32
    %c0_i32_1 = arith.constant 0 : i32
    return %c0_i32, %c0_i32_0 : i32, i32
  }
  func.func @transform_2(%arg0: i32) -> (i32, i32) {
    %c0_i32 = arith.constant 0 : i32
    %c0_i32_0 = arith.constant 0 : i32
    %c0_i32_1 = arith.constant 0 : i32
    return %c0_i32, %c0_i32_0 : i32, i32
  }
  func.func @transform_3(%arg0: i32) -> (i32, i32) {
    %c0_i32 = arith.constant 0 : i32
    %c0_i32_0 = arith.constant 0 : i32
    %c0_i32_1 = arith.constant 0 : i32
    return %c0_i32, %c0_i32_0 : i32, i32
  }
  func.func @transform_4(%arg0: i32) -> (i32, i32) {
    %c0_i32 = arith.constant 0 : i32
    %c0_i32_0 = arith.constant 0 : i32
    %c0_i32_1 = arith.constant 0 : i32
    return %c0_i32, %c0_i32_0 : i32, i32
  }
  func.func @transform_5(%arg0: i32) -> (i32, i32) {
    %c0_i32 = arith.constant 0 : i32
    %c0_i32_0 = arith.constant 0 : i32
    %c0_i32_1 = arith.constant 0 : i32
    return %c0_i32, %c0_i32_0 : i32, i32
  }
  func.func @transform_6(%arg0: i32) -> (i32, i32) {
    %c0_i32 = arith.constant 0 : i32
    %c0_i32_0 = arith.constant 0 : i32
    %c0_i32_1 = arith.constant 0 : i32
    return %c0_i32, %c0_i32_0 : i32, i32
  }
  func.func @transform_7(%arg0: i32) -> (i32, i32) {
    %c0_i32 = arith.constant 0 : i32
    %c0_i32_0 = arith.constant 0 : i32
    %c0_i32_1 = arith.constant 0 : i32
    return %c0_i32, %c0_i32_0 : i32, i32
  }
  func.func @transform_8(%arg0: i32) -> (i32, i32) {
    %c0_i32 = arith.constant 0 : i32
    %c0_i32_0 = arith.constant 0 : i32
    return %arg0, %c0_i32 : i32, i32
  }
}

</mosaic_0001>

<llo_original>
// kernel: tpu_custom_call.1
$region0: #{tpu_custom_call.1}
  #allocation0 [shape = 'u32[]', space=smem, size = 0x4, offset = 0x4, fixed_abs, tag = 'smem constant byte address 0x4 - core index']
  #allocation1 [shape = 'u32[72,128]{1,0:T(1,128)}', space=vmem, size = 0x9000, scoped, tag = 'internal scratch']
  %s0 = inlined_call_operand.hbm [shape: bf16[32,48], index: 0, kind: input, shape index: {}]
  %s1 = inlined_call_operand.vmem [shape: bf16[48,128], index: 1, kind: input, shape index: {}]
  %s2 = inlined_call_operand.vmem [shape: f32[1,128], index: 2, kind: input, shape index: {}]
  %s3 = inlined_call_operand.vmem [shape: f32[1,128], index: 3, kind: input, shape index: {}]
  %s4 = inlined_call_operand.vmem [shape: f32[1,128], index: 4, kind: input, shape index: {}]
  %s5 = inlined_call_operand.vmem [shape: f32[2,32], index: 5, kind: input, shape index: {}]
  %s6 = inlined_call_operand.vmem [shape: f32[32,2], index: 6, kind: input, shape index: {}]
  %s7 = inlined_call_operand.hbm [shape: f32[128,128], index: 7, kind: input, shape index: {}]
  %s8 = inlined_call_operand.hbm [shape: f32[32,128], index: 8, kind: output, shape index: {}]
  %s9 = sld [smem:[#allocation0]]
  $region50: #{tpu_custom_call.1} parent=0
    _
  %s11 = ssub.s32 1, %s9
  %s12 = scalar_select 0, %s11, %s9
  $region1: #{tpu_custom_call.1} parent=0
    #allocation2 [shape = 'u8[8192]{0}', space=vmem, size = 0x2000, scoped, tag = 'input window, operand 0, single buffered']
    #allocation3 [shape = 's32[1]{0}', space=sflag, size = 0x4, scoped, tag = 'scoped memory for tpu_custom_call.1']
    #allocation4 [shape = 's32[1]{0}', space=sflag, size = 0x4, scoped, tag = 'scoped memory for tpu_custom_call.1']
    #allocation5 [shape = 'u8[65536]{0}', space=vmem, size = 0x10000, scoped, tag = 'input window, operand 7, single buffered']
    #allocation6 [shape = 's32[1]{0}', space=sflag, size = 0x4, scoped, tag = 'scoped memory for tpu_custom_call.1']
    #allocation7 [shape = 'u8[16384]{0}', space=vmem, size = 0x4000, scoped, tag = 'output window, operand 0, single buffered']
    %13 = vsyncpa [#allocation3], 0
    %14 = vsyncpa [#allocation6], 0
    %15 = vsyncpa [#allocation4], 0
    // Predicated region
    $region2: #{tpu_custom_call.1} parent=1 // pred_check
      _
    $region3: #{tpu_custom_call.1} parent=1 // pred_check_branch
      %17 = sbr.rel (0) target = $region5
    $region4: #{tpu_custom_call.1} parent=1 // pred_region
      %19 = vsyncadd [#allocation3], 0
      %s20 = sshll.u32 %s0, 4
      %s21 = int_to_ptr.hbm [resolvable:$true] %s20
      %s22 = sshll.u32 [#allocation2], 4
      %s23 = int_to_ptr.vmem [resolvable:$true] %s22
      %28 = dma.hbm_to_vmem [thread:$0]  %s21, 256, %s23, [#allocation3], 64, 64, 4
    $region5: #{tpu_custom_call.1} parent=1 // pred_fallthru
      _
    // Predicated region
    $region6: #{tpu_custom_call.1} parent=1 // pred_check
      _
    $region7: #{tpu_custom_call.1} parent=1 // pred_check_branch
      %30 = sbr.rel (0) target = $region9
    $region8: #{tpu_custom_call.1} parent=1 // pred_region
      _
    $region9: #{tpu_custom_call.1} parent=1 // pred_fallthru
      _
    // Predicated region
    $region10: #{tpu_custom_call.1} parent=1 // pred_check
      _
    $region11: #{tpu_custom_call.1} parent=1 // pred_check_branch
      %32 = sbr.rel (0) target = $region13
    $region12: #{tpu_custom_call.1} parent=1 // pred_region
      _
    $region13: #{tpu_custom_call.1} parent=1 // pred_fallthru
      _
    // Predicated region
    $region14: #{tpu_custom_call.1} parent=1 // pred_check
      _
    $region15: #{tpu_custom_call.1} parent=1 // pred_check_branch
      %34 = sbr.rel (0) target = $region17
    $region16: #{tpu_custom_call.1} parent=1 // pred_region
      _
    $region17: #{tpu_custom_call.1} parent=1 // pred_fallthru
      _
    // Predicated region
    $region18: #{tpu_custom_call.1} parent=1 // pred_check
      _
    $region19: #{tpu_custom_call.1} parent=1 // pred_check_branch
      %36 = sbr.rel (0) target = $region21
    $region20: #{tpu_custom_call.1} parent=1 // pred_region
      _
    $region21: #{tpu_custom_call.1} parent=1 // pred_fallthru
      _
    // Predicated region
    $region22: #{tpu_custom_call.1} parent=1 // pred_check
      _
    $region23: #{tpu_custom_call.1} parent=1 // pred_check_branch
      %38 = sbr.rel (0) target = $region25
    $region24: #{tpu_custom_call.1} parent=1 // pred_region
      _
    $region25: #{tpu_custom_call.1} parent=1 // pred_fallthru
      _
    // Predicated region
    $region26: #{tpu_custom_call.1} parent=1 // pred_check
      _
    $region27: #{tpu_custom_call.1} parent=1 // pred_check_branch
      %40 = sbr.rel (0) target = $region29
    $region28: #{tpu_custom_call.1} parent=1 // pred_region
      _
    $region29: #{tpu_custom_call.1} parent=1 // pred_fallthru
      _
    // Predicated region
    $region30: #{tpu_custom_call.1} parent=1 // pred_check
      _
    $region31: #{tpu_custom_call.1} parent=1 // pred_check_branch
      %42 = sbr.rel (0) target = $region33
    $region32: #{tpu_custom_call.1} parent=1 // pred_region
      %44 = vsyncadd [#allocation6], 0
      %s45 = sshll.u32 %s7, 4
      %s46 = int_to_ptr.hbm [resolvable:$true] %s45
      %s47 = sshll.u32 [#allocation5], 4
      %s48 = int_to_ptr.vmem [resolvable:$true] %s47
      %53 = dma.hbm_to_vmem [thread:$0]  %s46, 2048, %s48, [#allocation6], 128, 128, 8
    $region33: #{tpu_custom_call.1} parent=1 // pred_fallthru
      _
    // Predicated region
    $region34: #{tpu_custom_call.1} parent=1 // pred_check
      _
    $region35: #{tpu_custom_call.1} parent=1 // pred_check_branch
      %55 = sbr.rel (0) target = $region37
    $region36: #{tpu_custom_call.1} parent=1 // pred_region
      %57 = dma.done [#allocation3], 256
    $region37: #{tpu_custom_call.1} parent=1 // pred_fallthru
      _
    // Predicated region
    $region38: #{tpu_custom_call.1} parent=1 // pred_check
      _
    $region39: #{tpu_custom_call.1} parent=1 // pred_check_branch
      %59 = sbr.rel (0) target = $region41
    $region40: #{tpu_custom_call.1} parent=1 // pred_region
      %61 = dma.done [#allocation6], 2048
    $region41: #{tpu_custom_call.1} parent=1 // pred_fallthru
      _
    %v63 = vld [vmem:[#allocation2] sm:$0xf]
    %v64 = vld [vmem:[#allocation2 + $0x4] sm:$0xf]
    %v65 = vld [vmem:[#allocation2 + $0x8] sm:$0xf]
    %v66 = vld [vmem:[#allocation2 + $0xc] sm:$0xf]
    %v67 = vld [vmem:[%s1] sm:$0xf]
    %v68 = vld [vmem:[%s1 + $0x4] sm:$0xf]
    %v69 = vld [vmem:[%s1 + $0x8] sm:$0xf]
    %v70 = vld [vmem:[%s1 + $0xc] sm:$0xf]
    %v71 = vld [vmem:[%s1 + $0x10] sm:$0xf]
    %v72 = vld [vmem:[%s1 + $0x14] sm:$0xf]
    %v73 = vld [vmem:[%s2] sm:$0x1]
    %v75 = vperm.slane %v73, 0
    %v81 = vunpack.c.l.b16 %v63
    %v82 = vunpack.c.l.b16 %v64
    %v83 = vunpack.c.l.b16 %v65
    %v84 = vunpack.c.l.b16 %v66
    %v85 = vpack.c.b16 %v82, %v81
    %v86 = vpack.c.b16 %v84, %v83
    %v93 = vunpack.c.l.b16 %v67
    %v94 = vunpack.c.l.b16 %v68
    %v95 = vunpack.c.l.b16 %v69
    %v96 = vunpack.c.l.b16 %v70
    %v97 = vunpack.c.l.b16 %v71
    %v98 = vunpack.c.l.b16 %v72
    %v99 = vpack.c.b16 %v94, %v93
    %v100 = vpack.c.b16 %v96, %v95
    %v101 = vpack.c.b16 %v98, %v97
    %vm105 = vcmask 392192
    %v107 = vsel %vm105, %v85, 0
    %v110 = vsel %vm105, %v86, 0
    %112 = vmatpush.bf16.msra.mxu0 0
    %113 = vmatpush.bf16.msra.mxu0 0
    %114 = vmatpush.bf16.msra.mxu0 0
    %115 = vmatpush.bf16.msra.mxu0 0
    %116 = vmatpush.bf16.msra.mxu0 0
    %117 = vmatpush.bf16.msra.mxu0 %v101
    %118 = vmatpush.bf16.msra.mxu0 %v100
    %119 = vmatpush.bf16.msra.mxu0 %v99
    %120 = vmatmul.bf16.gmra.mxu0 %v107
    %v121 = vpop.f32.mrf.mxu0
    %v122 = vadd.f32 %v75, %v121
    %v123 = vpop.f32.mrf.mxu0
    %v124 = vadd.f32 %v75, %v123
    %125 = vmatmul.bf16.gmra.mxu0 %v110
    %v126 = vpop.f32.mrf.mxu0
    %v127 = vadd.f32 %v75, %v126
    %v128 = vpop.f32.mrf.mxu0
    %v129 = vadd.f32 %v75, %v128
    %130 = vdwg.mxu0
    %v131 = vld [vmem:[%s5] sm:$0x3]
    %vm132 = vcmask 261120
    %v134 = vsel %vm132, %v131, 0
    %136 = vmatpush.msra.mxu0 0.0
    %137 = vmatpush.msra.mxu0 0.0
    %138 = vmatpush.msra.mxu0 0.0
    %139 = vmatpush.msra.mxu0 0.0
    %140 = vmatpush.msra.mxu0 0.0
    %141 = vmatpush.msra.mxu0 0.0
    %142 = vmatpush.msra.mxu0 0.0
    %143 = vmatpush.msra.mxu0 0.0
    %144 = vmatpush.msra.mxu0 0.0
    %145 = vmatpush.msra.mxu0 0.0
    %146 = vmatpush.msra.mxu0 0.0
    %147 = vmatpush.msra.mxu0 0.0
    %148 = vmatpush.msra.mxu0 %v129
    %149 = vmatpush.msra.mxu0 %v127
    %150 = vmatpush.msra.mxu0 %v124
    %151 = vmatpush.msra.mxu0 %v122
    %152 = vmatmul.f32.gmra.mxu0 %v134
    %v153 = vpop.f32.mrf.mxu0
    %v154 = vadd.f32 0.0, %v153
    %155 = vdwg.mxu0
    %v156 = vmul.f32 %v122, %v122
    %v157 = vmul.f32 %v124, %v124
    %v158 = vmul.f32 %v127, %v127
    %v159 = vmul.f32 %v129, %v129
    %160 = vmatpush.msra.mxu0 0.0
    %161 = vmatpush.msra.mxu0 0.0
    %162 = vmatpush.msra.mxu0 0.0
    %163 = vmatpush.msra.mxu0 0.0
    %164 = vmatpush.msra.mxu0 0.0
    %165 = vmatpush.msra.mxu0 0.0
    %166 = vmatpush.msra.mxu0 0.0
    %167 = vmatpush.msra.mxu0 0.0
    %168 = vmatpush.msra.mxu0 0.0
    %169 = vmatpush.msra.mxu0 0.0
    %170 = vmatpush.msra.mxu0 0.0
    %171 = vmatpush.msra.mxu0 0.0
    %172 = vmatpush.msra.mxu0 %v159
    %173 = vmatpush.msra.mxu0 %v158
    %174 = vmatpush.msra.mxu0 %v157
    %175 = vmatpush.msra.mxu0 %v156
    %176 = vmatmul.f32.gmra.mxu0 %v134
    %v177 = vpop.f32.mrf.mxu0
    %v178 = vadd.f32 0.0, %v177
    %179 = vdwg.mxu0
    %v180 = vld [vmem:[#allocation5] sm:$0xff]
    %v181 = vld [vmem:[#allocation5 + $0x8] sm:$0xff]
    %v182 = vld [vmem:[#allocation5 + $0x10] sm:$0xff]
    %v183 = vld [vmem:[#allocation5 + $0x18] sm:$0xff]
    %v184 = vld [vmem:[#allocation5 + $0x20] sm:$0xff]
    %v185 = vld [vmem:[#allocation5 + $0x28] sm:$0xff]
    %v186 = vld [vmem:[#allocation5 + $0x30] sm:$0xff]
    %v187 = vld [vmem:[#allocation5 + $0x38] sm:$0xff]
    %v188 = vld [vmem:[#allocation5 + $0x40] sm:$0xff]
    %v189 = vld [vmem:[#allocation5 + $0x48] sm:$0xff]
    %v190 = vld [vmem:[#allocation5 + $0x50] sm:$0xff]
    %v191 = vld [vmem:[#allocation5 + $0x58] sm:$0xff]
    %v192 = vld [vmem:[#allocation5 + $0x60] sm:$0xff]
    %v193 = vld [vmem:[#allocation5 + $0x68] sm:$0xff]
    %v194 = vld [vmem:[#allocation5 + $0x70] sm:$0xff]
    %v195 = vld [vmem:[#allocation5 + $0x78] sm:$0xff]
    %196 = vmatpush.msra.mxu0 %v195
    %197 = vmatpush.msra.mxu0 %v194
    %198 = vmatpush.msra.mxu0 %v193
    %199 = vmatpush.msra.mxu0 %v192
    %200 = vmatpush.msra.mxu0 %v191
    %201 = vmatpush.msra.mxu0 %v190
    %202 = vmatpush.msra.mxu0 %v189
    %203 = vmatpush.msra.mxu0 %v188
    %204 = vmatpush.msra.mxu0 %v187
    %205 = vmatpush.msra.mxu0 %v186
    %206 = vmatpush.msra.mxu0 %v185
    %207 = vmatpush.msra.mxu0 %v184
    %208 = vmatpush.msra.mxu0 %v183
    %209 = vmatpush.msra.mxu0 %v182
    %210 = vmatpush.msra.mxu0 %v181
    %211 = vmatpush.msra.mxu0 %v180
    %212 = vmatmul.f32.gmra.mxu0 %v154
    %v213 = vpop.f32.mrf.mxu0
    %v214 = vadd.f32 0.0, %v213
    %215 = vdwg.mxu0
    %v216 = vmul.f32 %v214, 0.015625
    %217 = vmatpush.msra.mxu0 %v195
    %218 = vmatpush.msra.mxu0 %v194
    %219 = vmatpush.msra.mxu0 %v193
    %220 = vmatpush.msra.mxu0 %v192
    %221 = vmatpush.msra.mxu0 %v191
    %222 = vmatpush.msra.mxu0 %v190
    %223 = vmatpush.msra.mxu0 %v189
    %224 = vmatpush.msra.mxu0 %v188
    %225 = vmatpush.msra.mxu0 %v187
    %226 = vmatpush.msra.mxu0 %v186
    %227 = vmatpush.msra.mxu0 %v185
    %228 = vmatpush.msra.mxu0 %v184
    %229 = vmatpush.msra.mxu0 %v183
    %230 = vmatpush.msra.mxu0 %v182
    %231 = vmatpush.msra.mxu0 %v181
    %232 = vmatpush.msra.mxu0 %v180
    %233 = vmatmul.f32.gmra.mxu0 %v178
    %v234 = vpop.f32.mrf.mxu0
    %v235 = vadd.f32 0.0, %v234
    %236 = vdwg.mxu0
    %v237 = vmul.f32 %v235, 0.015625
    %v238 = vmul.f32 %v216, %v216
    %v239 = vsub.f32 %v237, %v238
    %v240 = vmax.f32 %v239, 0.0
    %v241 = vadd.f32 %v240, 1e-05
    %v242 = vrsqrt.pop %v241
    %v243 = vmul.f32 %v242, %v241
    %v244 = vmul.f32 %v243, %v242
    %v245 = vmul.f32 0.5, %v244
    %v246 = vsub.f32 1.5, %v245
    %v247 = vmul.f32 %v242, %v246
    %vm248 = vweird.f32 %v241
    %vm249 = vweird.f32 %v242
    %vm250 = vmor %vm248, %vm249
    %v251 = vsel %vm250, %v242, %v247
    %v252 = vld [vmem:[%s6] sm:$0xff]
    %v253 = vld [vmem:[%s6 + $0x8] sm:$0xff]
    %v254 = vld [vmem:[%s6 + $0x10] sm:$0xff]
    %v255 = vld [vmem:[%s6 + $0x18] sm:$0xff]
    %vm256 = vcmask 15360
    %v258 = vsel %vm256, %v252, 0
    %v261 = vsel %vm256, %v253, 0
    %v264 = vsel %vm256, %v254, 0
    %v267 = vsel %vm256, %v255, 0
    %vm269 = vcmask 1041408
    %v271 = vsel %vm269, %v216, 0
    %273 = vmatpush.msra.mxu0 0.0
    %274 = vmatpush.msra.mxu0 0.0
    %275 = vmatpush.msra.mxu0 0.0
    %276 = vmatpush.msra.mxu0 0.0
    %277 = vmatpush.msra.mxu0 0.0
    %278 = vmatpush.msra.mxu0 0.0
    %279 = vmatpush.msra.mxu0 0.0
    %280 = vmatpush.msra.mxu0 0.0
    %281 = vmatpush.msra.mxu0 0.0
    %282 = vmatpush.msra.mxu0 0.0
    %283 = vmatpush.msra.mxu0 0.0
    %284 = vmatpush.msra.mxu0 0.0
    %285 = vmatpush.msra.mxu0 0.0
    %286 = vmatpush.msra.mxu0 0.0
    %287 = vmatpush.msra.mxu0 0.0
    %288 = vmatpush.msra.mxu0 %v271
    %289 = vmatmul.f32.gmra.mxu0 %v258
    %v290 = vpop.f32.mrf.mxu0
    %v291 = vadd.f32 0.0, %v290
    %292 = vmatmul.f32.gmra.mxu0 %v261
    %v293 = vpop.f32.mrf.mxu0
    %v294 = vadd.f32 0.0, %v293
    %295 = vmatmul.f32.gmra.mxu0 %v264
    %v296 = vpop.f32.mrf.mxu0
    %v297 = vadd.f32 0.0, %v296
    %298 = vmatmul.f32.gmra.mxu0 %v267
    %v299 = vpop.f32.mrf.mxu0
    %v300 = vadd.f32 0.0, %v299
    %301 = vdwg.mxu0
    %v303 = vsel %vm269, %v251, 0
    %305 = vmatpush.msra.mxu0 0.0
    %306 = vmatpush.msra.mxu0 0.0
    %307 = vmatpush.msra.mxu0 0.0
    %308 = vmatpush.msra.mxu0 0.0
    %309 = vmatpush.msra.mxu0 0.0
    %310 = vmatpush.msra.mxu0 0.0
    %311 = vmatpush.msra.mxu0 0.0
    %312 = vmatpush.msra.mxu0 0.0
    %313 = vmatpush.msra.mxu0 0.0
    %314 = vmatpush.msra.mxu0 0.0
    %315 = vmatpush.msra.mxu0 0.0
    %316 = vmatpush.msra.mxu0 0.0
    %317 = vmatpush.msra.mxu0 0.0
    %318 = vmatpush.msra.mxu0 0.0
    %319 = vmatpush.msra.mxu0 0.0
    %320 = vmatpush.msra.mxu0 %v303
    %321 = vmatmul.f32.gmra.mxu0 %v258
    %v322 = vpop.f32.mrf.mxu0
    %v323 = vadd.f32 0.0, %v322
    %324 = vmatmul.f32.gmra.mxu0 %v261
    %v325 = vpop.f32.mrf.mxu0
    %v326 = vadd.f32 0.0, %v325
    %327 = vmatmul.f32.gmra.mxu0 %v264
    %v328 = vpop.f32.mrf.mxu0
    %v329 = vadd.f32 0.0, %v328
    %330 = vmatmul.f32.gmra.mxu0 %v267
    %v331 = vpop.f32.mrf.mxu0
    %v332 = vadd.f32 0.0, %v331
    %333 = vdwg.mxu0
    %v334 = vsub.f32 %v122, %v291
    %v335 = vsub.f32 %v124, %v294
    %v336 = vsub.f32 %v127, %v297
    %v337 = vsub.f32 %v129, %v300
    %v338 = vmul.f32 %v334, %v323
    %v339 = vmul.f32 %v335, %v326
    %v340 = vmul.f32 %v336, %v329
    %v341 = vmul.f32 %v337, %v332
    %v342 = vld [vmem:[%s3] sm:$0x1]
    %v344 = vperm.slane %v342, 0
    %v346 = vmul.f32 %v338, %v344
    %v347 = vmul.f32 %v339, %v344
    %v348 = vmul.f32 %v340, %v344
    %v349 = vmul.f32 %v341, %v344
    %v350 = vld [vmem:[%s4] sm:$0x1]
    %v352 = vperm.slane %v350, 0
    %v354 = vadd.f32 %v346, %v352
    %v355 = vadd.f32 %v347, %v352
    %v356 = vadd.f32 %v348, %v352
    %v357 = vadd.f32 %v349, %v352
    %v358 = vmin.f32 %v354, 20.0
    %v359 = vmin.f32 %v355, 20.0
    %v360 = vmin.f32 %v356, 20.0
    %v361 = vmin.f32 %v357, 20.0
    %v362 = vmul.f32 %v358, 1.442695
    %v363 = vpow.pop %v362
    %v364 = vmul.f32 %v359, 1.442695
    %v365 = vpow.pop %v364
    %v366 = vmul.f32 %v360, 1.442695
    %v367 = vpow.pop %v366
    %v368 = vmul.f32 %v361, 1.442695
    %v369 = vpow.pop %v368
    %v370 = vadd.f32 %v363, 2.0
    %v371 = vadd.f32 %v365, 2.0
    %v372 = vadd.f32 %v367, 2.0
    %v373 = vadd.f32 %v369, 2.0
    %v374 = vmul.f32 %v363, %v370
    %v375 = vmul.f32 %v365, %v371
    %v376 = vmul.f32 %v367, %v372
    %v377 = vmul.f32 %v369, %v373
    %v378 = vadd.f32 %v374, 2.0
    %v379 = vadd.f32 %v375, 2.0
    %v380 = vadd.f32 %v376, 2.0
    %v381 = vadd.f32 %v377, 2.0
    %v382 = vrcp.pop %v378
    %v383 = vrcp.pop %v379
    %v384 = vrcp.pop %v380
    %v385 = vrcp.pop %v381
    %v386 = vmul.f32 %v374, %v382
    %v387 = vmul.f32 %v375, %v383
    %v388 = vmul.f32 %v376, %v384
    %v389 = vmul.f32 %v377, %v385
    %v390 = vmul.f32 %v354, %v386
    %v391 = vmul.f32 %v355, %v387
    %v392 = vmul.f32 %v356, %v388
    %v393 = vmul.f32 %v357, %v389
    %394 = vst [vmem:[#allocation7] sm:$0xff] %v390
    %395 = vst [vmem:[#allocation7 + $0x8] sm:$0xff] %v391
    %396 = vst [vmem:[#allocation7 + $0x10] sm:$0xff] %v392
    %397 = vst [vmem:[#allocation7 + $0x18] sm:$0xff] %v393
    // Predicated region
    $region42: #{tpu_custom_call.1} parent=1 // pred_check
      _
    $region43: #{tpu_custom_call.1} parent=1 // pred_check_branch
      %399 = sbr.rel (0) target = $region45
    $region44: #{tpu_custom_call.1} parent=1 // pred_region
      %401 = vsyncadd [#allocation4], 0
      %s402 = sshll.u32 [#allocation7], 4
      %s403 = int_to_ptr.vmem [resolvable:$true] %s402
      %s404 = sshll.u32 %s8, 4
      %s405 = int_to_ptr.hbm [resolvable:$true] %s404
      %410 = dma.vmem_to_hbm [thread:$0]  %s403, 512, %s405, [#allocation4], 128, 128, 8
    $region45: #{tpu_custom_call.1} parent=1 // pred_fallthru
      _
    // Predicated region
    $region46: #{tpu_custom_call.1} parent=1 // pred_check
      _
    $region47: #{tpu_custom_call.1} parent=1 // pred_check_branch
      %412 = sbr.rel (0) target = $region49
    $region48: #{tpu_custom_call.1} parent=1 // pred_region
      %414 = dma.done [#allocation4], 512
    $region49: #{tpu_custom_call.1} parent=1 // pred_fallthru
      _
    %415 = vsyncpa [#allocation3], 1
    %416 = vsyncpa [#allocation6], 1
    %417 = vsyncpa [#allocation4], 1

</llo_original>
